<compile_context>
chip_gen: v5e
topology: v5e:2x2
jax: 0.10.0
libtpu: 0.0.40
codegen_flags: <defaults>
</compile_context>

<pallas_src>
import jax
import jax.numpy as jnp
from jax.experimental import pallas as pl
from jax.experimental.pallas import tpu as pltpu


def _pick_tiles(B, H, W, block_batch=None, block_rows=None):
    """Choose (Bt, Ht): batch-tile and row-tile sizes (divisors of B and H)."""
    row_bytes = 4 * W
    # ~2 MiB of f32 input per block: with double-buffered in/out blocks this is
    # ~8 MiB VMEM, safe on v5e/v6e (128 MiB) and v7x (64 MiB).
    target = 2 << 20

    if block_rows is not None:
        Ht = int(block_rows)
    elif H * row_bytes <= target:
        Ht = H                                  # whole image fits: no row tiling
    else:
        cands = [d for d in range(8, H, 8) if H % d == 0]
        fit = [d for d in cands if d * row_bytes <= target]
        # TODO(synk): if H has no divisor that is a multiple of 8, Ht falls back
        # to H; for huge images pad H in the wrapper or use cdiv-grid masking.
        Ht = max(fit) if fit else (min(cands) if cands else H)
    assert H % Ht == 0 and (Ht == H or Ht % 8 == 0), \
        "row tile must divide H and be a multiple of 8 (or equal H)"
    nh = H // Ht

    if block_batch is not None:
        Bt = int(block_batch)
    else:
        max_bt = max(1, target // max(1, Ht * row_bytes))
        Bt = 1
        for d in range(1, min(B, max_bt) + 1):
            if B % d == 0:
                Bt = d
        # Force >= 2 grid steps on a "parallel" axis so v7x's 2 TensorCores both
        # get work (v5e/v6e have 1 TC and are unaffected).
        if (B // Bt) * nh == 1:
            if B > 1:
                Bt = max(d for d in range(1, B) if B % d == 0)
            elif nh == 1 and H >= 16 and H % 16 == 0:
                Ht = H // 2
                nh = 2
    assert B % Bt == 0
    return Bt, Ht


def _masked_col_shifts(v, W):
    """left[..., j] = v[..., j-1] (0 at j=0); right[..., j] = v[..., j+1] (0 at j=W-1)."""
    lane = jax.lax.broadcasted_iota(jnp.int32, v.shape, v.ndim - 1)
    left = jnp.where(lane == 0, 0.0, pltpu.roll(v, 1, axis=v.ndim - 1))
    right = jnp.where(lane == W - 1, 0.0, pltpu.roll(v, W - 1, axis=v.ndim - 1))
    return left, right


def _d_s(v, W):
    """Separable Sobel horizontal passes: d = x(j+1)-x(j-1), s = x(j-1)+2x(j)+x(j+1)."""
    left, right = _masked_col_shifts(v, W)
    return right - left, left + 2.0 * v + right


def _make_sobel_kernel_nohalo(Bt, Ht, W):
    """Whole image height in one tile: the +/-1 rows outside are zero padding."""

    def kernel(x_ref, o_ref):
        x = x_ref[...]                                        # (Bt, Ht, W)
        d, s = _d_s(x, W)
        row = jax.lax.broadcasted_iota(jnp.int32, (Bt, Ht, W), 1)
        d_up = jnp.where(row == 0, 0.0, pltpu.roll(d, 1, axis=1))       # d at row i-1
        d_dn = jnp.where(row == Ht - 1, 0.0, pltpu.roll(d, Ht - 1, axis=1))  # d at row i+1
        s_up = jnp.where(row == 0, 0.0, pltpu.roll(s, 1, axis=1))
        s_dn = jnp.where(row == Ht - 1, 0.0, pltpu.roll(s, Ht - 1, axis=1))
        gx = d_up + 2.0 * d + d_dn
        gy = s_dn - s_up
        o_ref[...] = jnp.abs(gx) + jnp.abs(gy)

    return kernel


def _make_sobel_kernel_halo(Bt, Ht, W, Rh):
    """Row-chunked kernel: halo rows come from thin 8-row blocks of the input."""

    def kernel(x_ref, top_ref, bot_ref, o_ref):
        h = pl.program_id(1)
        nh = pl.num_programs(1)

        x = x_ref[...]                                        # (Bt, Ht, W)
        # Row just above / below the chunk; zero at the image border.
        top = jnp.where(h > 0, top_ref[:, Rh - 1:Rh, :], 0.0)        # (Bt, 1, W)
        bot = jnp.where(h < nh - 1, bot_ref[:, 0:1, :], 0.0)         # (Bt, 1, W)

        d, s = _d_s(x, W)
        d_t, s_t = _d_s(top, W)
        d_b, s_b = _d_s(bot, W)

        row = jax.lax.broadcasted_iota(jnp.int32, (Bt, Ht, W), 1)
        d_up = jnp.where(row == 0, d_t, pltpu.roll(d, 1, axis=1))
        d_dn = jnp.where(row == Ht - 1, d_b, pltpu.roll(d, Ht - 1, axis=1))
        s_up = jnp.where(row == 0, s_t, pltpu.roll(s, 1, axis=1))
        s_dn = jnp.where(row == Ht - 1, s_b, pltpu.roll(s, Ht - 1, axis=1))

        gx = d_up + 2.0 * d + d_dn
        gy = s_dn - s_up
        o_ref[...] = jnp.abs(gx) + jnp.abs(gy)

    return kernel


def gradient_net(x, *, block_rows=None, block_batch=None):
    """x: (N, C, H, W). Depthwise Sobel gradient magnitude (exact for C == 1)."""
    N, C, H, W = x.shape
    B = N * C
    xf = x.reshape(B, H, W).astype(jnp.float32)

    Bt, Ht = _pick_tiles(B, H, W, block_batch=block_batch, block_rows=block_rows)
    nb, nh = B // Bt, H // Ht

    if nh == 1:
        # Whole height in one row tile: no halo inputs, no halo DMAs.
        cost = pl.CostEstimate(flops=12 * B * H * W, transcendentals=0,
                               bytes_accessed=8 * B * H * W)
        out = pl.pallas_call(
            _make_sobel_kernel_nohalo(Bt, H, W),
            out_shape=jax.ShapeDtypeStruct((B, H, W), jnp.float32),
            grid_spec=pltpu.PrefetchScalarGridSpec(
                num_scalar_prefetch=0,
                grid=(nb,),
                in_specs=[pl.BlockSpec((Bt, H, W), lambda b: (b, 0, 0))],
                out_specs=pl.BlockSpec((Bt, H, W), lambda b: (b, 0, 0)),
            ),
            compiler_params=pltpu.CompilerParams(
                dimension_semantics=("parallel",)),
            cost_estimate=cost,
        )(xf)
    else:
        Rh = 8                              # halo block height (rows)
        hb = Ht // Rh                       # row-tile stride in halo-block units
        n_rblk = H // Rh                    # number of halo blocks along H
        cost = pl.CostEstimate(
            flops=12 * B * H * W, transcendentals=0,
            bytes_accessed=8 * B * H * W + 2 * 4 * B * nh * Rh * W)
        out = pl.pallas_call(
            _make_sobel_kernel_halo(Bt, Ht, W, Rh),
            out_shape=jax.ShapeDtypeStruct((B, H, W), jnp.float32),
            grid_spec=pltpu.PrefetchScalarGridSpec(
                num_scalar_prefetch=0,
                grid=(nb, nh),
                in_specs=[
                    # main row-chunk
                    pl.BlockSpec((Bt, Ht, W), lambda b, h: (b, h, 0)),
                    # thin halo block just above the chunk (clamped at the top)
                    pl.BlockSpec((Bt, Rh, W),
                                 lambda b, h: (b, jnp.maximum(h * hb - 1, 0), 0)),
                    # thin halo block just below the chunk (clamped at the bottom)
                    pl.BlockSpec((Bt, Rh, W),
                                 lambda b, h: (b, jnp.minimum((h + 1) * hb, n_rblk - 1), 0)),
                ],
                out_specs=pl.BlockSpec((Bt, Ht, W), lambda b, h: (b, h, 0)),
            ),
            compiler_params=pltpu.CompilerParams(
                dimension_semantics=("parallel", "parallel")),
            cost_estimate=cost,
        )(xf, xf, xf)

    return out.reshape(N, C, H, W)


def _reference(x):
    """Pure-JAX reference (same math, no Pallas)."""
    kx = jnp.array([[-1., 0., 1.], [-2., 0., 2.], [-1., 0., 1.]], jnp.float32)
    ky = jnp.array([[-1., -2., -1.], [0., 0., 0.], [1., 2., 1.]], jnp.float32)
    N, C, H, W = x.shape
    xp = jnp.pad(x.reshape(N * C, H, W).astype(jnp.float32),
                 ((0, 0), (1, 1), (1, 1)))
    gx = jnp.zeros((N * C, H, W), jnp.float32)
    gy = jnp.zeros((N * C, H, W), jnp.float32)
    for di in range(3):
        for dj in range(3):
            win = xp[:, di:di + H, dj:dj + W]
            gx = gx + kx[di, dj] * win
            gy = gy + ky[di, dj] * win
    return (jnp.abs(gx) + jnp.abs(gy)).reshape(N, C, H, W)


if __name__ == "__main__":
    k0, k1, k2 = jax.random.split(jax.random.PRNGKey(0), 3)

    # Single-channel images (the module's (1,1,3,3) weights with groups=C imply
    # C == 1).  W = 128 keeps all loads/stores lane-dense (one full vreg width).
    x1 = jax.random.normal(k0, (2, 1, 16, 128), dtype=jnp.float32)
    out1 = gradient_net(x1)                     # no-halo kernel, grid (2,)
    jax.block_until_ready(out1)
    assert out1.shape == x1.shape
    assert jnp.allclose(out1, _reference(x1), atol=1e-5, rtol=1e-5)

    # Row-tiled path with halo rows (forced small row tiles).
    x2 = jax.random.normal(k1, (2, 1, 32, 128), dtype=jnp.float32)
    out2 = gradient_net(x2, block_rows=8, block_batch=1)  # halo kernel, grid (2, 4)
    jax.block_until_ready(out2)
    assert jnp.allclose(out2, _reference(x2), atol=1e-5, rtol=1e-5)

    # Single image: rows are auto-split in two so both v7x TensorCores get work.
    x3 = jax.random.normal(k2, (1, 1, 16, 128), dtype=jnp.float32)
    out3 = gradient_net(x3)                     # halo kernel, grid (1, 2)
    jax.block_until_ready(out3)
    assert jnp.allclose(out3, _reference(x3), atol=1e-5, rtol=1e-5)

    print("KERNEL_OK")
</pallas_src>

<mosaic_0001>
module attributes {stable_mosaic.version = 11 : i64} {
  func.func @kernel(%arg0: i32, %arg1: memref<1x16x128xf32, #tpu.memory_space<vmem>>, %arg2: memref<1x16x128xf32, #tpu.memory_space<vmem>>) attributes {dimension_semantics = [#tpu.dimension_semantics<parallel>], iteration_bounds = array<i64: 2>, scalar_prefetch = 0 : i64, scratch_operands = 0 : i64, tpu.core_type = #tpu.core_type<tc>, window_params = [{transform_indices = @transform_0, window_bounds = array<i64: 1, 16, 128>}, {transform_indices = @transform_1, window_bounds = array<i64: 1, 16, 128>}]} {
    %c0 = arith.constant 0 : index
    %c0_0 = arith.constant 0 : index
    %c0_1 = arith.constant 0 : index
    %0 = vector.load %arg1[%c0, %c0_0, %c0_1] : memref<1x16x128xf32, #tpu.memory_space<vmem>>, vector<1x16x128xf32>
    %1 = tpu.iota {dimensions = array<i32: 2>} : vector<1x16x128xi32>
    %c0_i32 = arith.constant 0 : i32
    %2 = vector.broadcast %c0_i32 : i32 to vector<1x16x128xi32>
    %3 = arith.cmpi eq, %1, %2 : vector<1x16x128xi32>
    %c1_i32 = arith.constant 1 : i32
    %4 = tpu.dynamic_rotate %0 by %c1_i32 dim 2 : vector<1x16x128xf32>, i32 -> vector<1x16x128xf32>
    %cst = arith.constant 0.000000e+00 : f32
    %5 = vector.broadcast %cst : f32 to vector<1x16x128xf32>
    %6 = arith.select %3, %5, %4 : vector<1x16x128xi1>, vector<1x16x128xf32>
    %c127_i32 = arith.constant 127 : i32
    %7 = vector.broadcast %c127_i32 : i32 to vector<1x16x128xi32>
    %8 = arith.cmpi eq, %1, %7 : vector<1x16x128xi32>
    %c127_i32_2 = arith.constant 127 : i32
    %9 = tpu.dynamic_rotate %0 by %c127_i32_2 dim 2 : vector<1x16x128xf32>, i32 -> vector<1x16x128xf32>
    %cst_3 = arith.constant 0.000000e+00 : f32
    %10 = vector.broadcast %cst_3 : f32 to vector<1x16x128xf32>
    %11 = arith.select %8, %10, %9 : vector<1x16x128xi1>, vector<1x16x128xf32>
    %12 = arith.subf %11, %6 : vector<1x16x128xf32>
    %cst_4 = arith.constant 2.000000e+00 : f32
    %13 = vector.broadcast %cst_4 : f32 to vector<1x16x128xf32>
    %14 = arith.mulf %13, %0 : vector<1x16x128xf32>
    %15 = arith.addf %6, %14 : vector<1x16x128xf32>
    %16 = arith.addf %15, %11 : vector<1x16x128xf32>
    %17 = tpu.iota {dimensions = array<i32: 1>} : vector<1x16x128xi32>
    %c0_i32_5 = arith.constant 0 : i32
    %18 = vector.broadcast %c0_i32_5 : i32 to vector<1x16x128xi32>
    %19 = arith.cmpi eq, %17, %18 : vector<1x16x128xi32>
    %c1_i32_6 = arith.constant 1 : i32
    %20 = tpu.dynamic_rotate %12 by %c1_i32_6 dim 1 : vector<1x16x128xf32>, i32 -> vector<1x16x128xf32>
    %cst_7 = arith.constant 0.000000e+00 : f32
    %21 = vector.broadcast %cst_7 : f32 to vector<1x16x128xf32>
    %22 = arith.select %19, %21, %20 : vector<1x16x128xi1>, vector<1x16x128xf32>
    %c15_i32 = arith.constant 15 : i32
    %23 = vector.broadcast %c15_i32 : i32 to vector<1x16x128xi32>
    %24 = arith.cmpi eq, %17, %23 : vector<1x16x128xi32>
    %c15_i32_8 = arith.constant 15 : i32
    %25 = tpu.dynamic_rotate %12 by %c15_i32_8 dim 1 : vector<1x16x128xf32>, i32 -> vector<1x16x128xf32>
    %cst_9 = arith.constant 0.000000e+00 : f32
    %26 = vector.broadcast %cst_9 : f32 to vector<1x16x128xf32>
    %27 = arith.select %24, %26, %25 : vector<1x16x128xi1>, vector<1x16x128xf32>
    %c0_i32_10 = arith.constant 0 : i32
    %28 = vector.broadcast %c0_i32_10 : i32 to vector<1x16x128xi32>
    %29 = arith.cmpi eq, %17, %28 : vector<1x16x128xi32>
    %c1_i32_11 = arith.constant 1 : i32
    %30 = tpu.dynamic_rotate %16 by %c1_i32_11 dim 1 : vector<1x16x128xf32>, i32 -> vector<1x16x128xf32>
    %cst_12 = arith.constant 0.000000e+00 : f32
    %31 = vector.broadcast %cst_12 : f32 to vector<1x16x128xf32>
    %32 = arith.select %29, %31, %30 : vector<1x16x128xi1>, vector<1x16x128xf32>
    %c15_i32_13 = arith.constant 15 : i32
    %33 = vector.broadcast %c15_i32_13 : i32 to vector<1x16x128xi32>
    %34 = arith.cmpi eq, %17, %33 : vector<1x16x128xi32>
    %c15_i32_14 = arith.constant 15 : i32
    %35 = tpu.dynamic_rotate %16 by %c15_i32_14 dim 1 : vector<1x16x128xf32>, i32 -> vector<1x16x128xf32>
    %cst_15 = arith.constant 0.000000e+00 : f32
    %36 = vector.broadcast %cst_15 : f32 to vector<1x16x128xf32>
    %37 = arith.select %34, %36, %35 : vector<1x16x128xi1>, vector<1x16x128xf32>
    %cst_16 = arith.constant 2.000000e+00 : f32
    %38 = vector.broadcast %cst_16 : f32 to vector<1x16x128xf32>
    %39 = arith.mulf %38, %12 : vector<1x16x128xf32>
    %40 = arith.addf %22, %39 : vector<1x16x128xf32>
    %41 = arith.addf %40, %27 : vector<1x16x128xf32>
    %42 = arith.subf %37, %32 : vector<1x16x128xf32>
    %43 = math.absf %41 : vector<1x16x128xf32>
    %44 = math.absf %42 : vector<1x16x128xf32>
    %45 = arith.addf %43, %44 : vector<1x16x128xf32>
    %c0_17 = arith.constant 0 : index
    %c0_18 = arith.constant 0 : index
    %c0_19 = arith.constant 0 : index
    %46 = vector.load %arg2[%c0_17, %c0_18, %c0_19] : memref<1x16x128xf32, #tpu.memory_space<vmem>>, vector<1x16x128xf32>
    tpu.vector_store %arg2[%c0_17, %c0_18, %c0_19], %45 {strides = array<i32>} : memref<1x16x128xf32, #tpu.memory_space<vmem>>, vector<1x16x128xf32>,
    return
  }
  func.func @transform_0(%arg0: i32) -> (i32, i32, i32) {
    %c0_i32 = arith.constant 0 : i32
    %c0_i32_0 = arith.constant 0 : i32
    %c0_i32_1 = arith.constant 0 : i32
    return %arg0, %c0_i32, %c0_i32_0 : i32, i32, i32
  }
  func.func @transform_1(%arg0: i32) -> (i32, i32, i32) {
    %c0_i32 = arith.constant 0 : i32
    %c0_i32_0 = arith.constant 0 : i32
    %c0_i32_1 = arith.constant 0 : i32
    return %arg0, %c0_i32, %c0_i32_0 : i32, i32, i32
  }
}

</mosaic_0001>

<llo_original>
// kernel: tpu_custom_call.1
$region0: #{tpu_custom_call.1}
  #allocation0 [shape = 'u32[]', space=smem, size = 0x4, offset = 0x4, fixed_abs, tag = 'smem constant byte address 0x4 - core index']
  #allocation1 [shape = 'u32[72,128]{1,0:T(1,128)}', space=vmem, size = 0x9000, scoped, tag = 'internal scratch']
  %s0 = inlined_call_operand.hbm [shape: f32[2,16,128], index: 0, kind: input, shape index: {}]
  %s1 = inlined_call_operand.hbm [shape: f32[2,16,128], index: 1, kind: output, shape index: {}]
  %s2 = sld [smem:[#allocation0]]
  $region41: #{tpu_custom_call.1} parent=0
    _
  %s4 = ssub.s32 1, %s2
  %s5 = scalar_select 0, %s4, %s2
  $region1: #{tpu_custom_call.1} parent=0
    #allocation2 [shape = 'u8[16384]{0}', space=vmem, size = 0x4000, scoped, tag = 'input window, operand 0']
    #allocation3 [shape = 's32[2]{0}', space=sflag, size = 0x8, scoped, tag = 'scoped memory for tpu_custom_call.1']
    #allocation4 [shape = 's32[2]{0}', space=sflag, size = 0x8, scoped, tag = 'scoped memory for tpu_custom_call.1']
    #allocation5 [shape = 'u8[16384]{0}', space=vmem, size = 0x4000, scoped, tag = 'output window, operand 0']
    %6 = vsyncpa [#allocation3], 0
    %s7 = scalar_lea.sflag [#allocation3], 1
    %8 = vsyncpa %s7, 0
    %9 = vsyncpa [#allocation4], 0
    %s10 = scalar_lea.sflag [#allocation4], 1
    %11 = vsyncpa %s10, 0
    loop: start=0, step=1, limit=4
    $region2: #{tpu_custom_call.1} parent=1 // loop_pre_header
      _
    $region3: #{tpu_custom_call.1} parent=1 // loop_header
      %s13 = sphi 0, %s17
      %p14 = scmp.ge.s32.totalorder %s13, 4
      %s23 = sphi 0, %s25
      %s26 = sphi 0, %s23
      %s27 = sphi 0, %s26
      %s43 = sphi 0, %s27
      %s49 = sphi 0, %s51
      %s52 = sphi 0, %s49
      %s53 = sphi 0, %s52
      %s69 = sphi 0, %s53
    $region4: #{tpu_custom_call.1} parent=1 // loop_header_branch
      %16 = sbr.rel (%p14) target = $region8
    $region5: #{tpu_custom_call.1} parent=1 // loop_body
      %s18 = ssub.s32 %s13, 1
      %s19 = ssub.s32 %s13, 2
      %s20 = sadd.s32 %s13, 1
      %s21 = ssub.s32 %s13, %s20
      %p22 = scmp.eq.s32.totalorder %s21, 0
      %s24 = sadd.s32 %s23, 1
      %s25 = scalar_select %p22, %s23, %s24
      %p28 = pneg %p22
      %p29 = scmp.eq.s32.totalorder %s13, 1
      %p30 = por %p28, %p29
      %p31 = scmp.ne.s32.totalorder %s23, %s26
      %p32 = scmp.eq.s32.totalorder %s13, 0
      %p33 = por %p31, %p32
      %p34 = scmp.ne.s32.totalorder %s23, %s26
      %p35 = scmp.eq.s32.totalorder %s18, 1
      %p36 = por %p34, %p35
      %p37 = scmp.ne.s32.totalorder %s26, %s27
      %p38 = scmp.eq.s32.totalorder %s18, 0
      %p39 = por %p37, %p38
      %p40 = scmp.ne.s32.totalorder %s26, %s27
      %p41 = scmp.eq.s32.totalorder %s19, 1
      %p42 = por %p40, %p41
      %p44 = scmp.ne.s32.totalorder %s27, %s43
      %p45 = scmp.eq.s32.totalorder %s19, 0
      %p46 = por %p44, %p45
      %s47 = ssub.s32 %s13, %s20
      %p48 = scmp.eq.s32.totalorder %s47, 0
      %s50 = sadd.s32 %s49, 1
      %s51 = scalar_select %p48, %s49, %s50
      %p54 = pneg %p48
      %p55 = scmp.eq.s32.totalorder %s13, 1
      %p56 = por %p54, %p55
      %p57 = scmp.ne.s32.totalorder %s49, %s52
      %p58 = scmp.eq.s32.totalorder %s13, 0
      %p59 = por %p57, %p58
      %p60 = scmp.ne.s32.totalorder %s49, %s52
      %p61 = scmp.eq.s32.totalorder %s18, 1
      %p62 = por %p60, %p61
      %p63 = scmp.ne.s32.totalorder %s52, %s53
      %p64 = scmp.eq.s32.totalorder %s18, 0
      %p65 = por %p63, %p64
      %p66 = scmp.ne.s32.totalorder %s52, %s53
      %p67 = scmp.eq.s32.totalorder %s19, 1
      %p68 = por %p66, %p67
      %p70 = scmp.ne.s32.totalorder %s53, %s69
      %p71 = scmp.eq.s32.totalorder %s19, 0
      %p72 = por %p70, %p71
      %p73 = scmp.le.s32.totalorder 1, %s13
      %p74 = scmp.lt.s32.totalorder %s13, 3
      %p75 = pnand %p73, %p74
      %p76 = pneg %p75
      // Predicated region
      $region9: #{tpu_custom_call.1} parent=5 // pred_check
        _
      $region10: #{tpu_custom_call.1} parent=5 // pred_check_branch
        %78 = sbr.rel (%p75) target = $region12
      $region11: #{tpu_custom_call.1} parent=5 // pred_region
        %s79 = ssub.s32 %s13, 1
      $region12: #{tpu_custom_call.1} parent=5 // pred_fallthru
        _
      %p80 = scmp.lt.s32.totalorder %s13, 2
      // Predicated region
      $region13: #{tpu_custom_call.1} parent=5 // pred_check
        %p81 = pneg %p80
      $region14: #{tpu_custom_call.1} parent=5 // pred_check_branch
        %83 = sbr.rel (%p81) target = $region16
      $region15: #{tpu_custom_call.1} parent=5 // pred_region
        // Predicated region
        $region17: #{tpu_custom_call.1} parent=15 // pred_check
          %p84 = pneg %p33
        $region18: #{tpu_custom_call.1} parent=15 // pred_check_branch
          %86 = sbr.rel (%p84) target = $region20
        $region19: #{tpu_custom_call.1} parent=15 // pred_region
          %s87 = sand.u32 %s23, 1
          %s88 = scalar_lea.sflag [#allocation3], %s87
          %s89 = sand.u32 %s23, 1
          %s90 = smul.addr %s89, 16
          %s91 = scalar_lea.vmem [#allocation2], %s90
          %93 = vsyncadd %s88, 0
          %s94 = smul.addr %s13, 2
          %s95 = smul.addr %s94, 8
          %s96 = scalar_lea.hbm %s0, %s95
          %s97 = sshll.u32 %s96, 4
          %s98 = int_to_ptr.hbm [resolvable:$true] %s97
          %s99 = sshll.u32 %s91, 4
          %s100 = int_to_ptr.vmem [resolvable:$true] %s99
          %105 = dma.hbm_to_vmem [thread:$0]  %s98, 256, %s100, %s88, 128, 128, 8
        $region20: #{tpu_custom_call.1} parent=15 // pred_fallthru
          _
      $region16: #{tpu_custom_call.1} parent=5 // pred_fallthru
        _
      %p106 = scmp.le.s32.totalorder 1, %s13
      %p107 = scmp.lt.s32.totalorder %s13, 3
      %p108 = pnand %p106, %p107
      %p109 = pneg %p108
      // Predicated region
      $region21: #{tpu_custom_call.1} parent=5 // pred_check
        _
      $region22: #{tpu_custom_call.1} parent=5 // pred_check_branch
        %111 = sbr.rel (%p108) target = $region24
      $region23: #{tpu_custom_call.1} parent=5 // pred_region
        %s112 = ssub.s32 %s13, 1
        %s113 = sand.u32 %s26, 1
        %s114 = scalar_lea.sflag [#allocation3], %s113
        %s115 = sand.u32 %s26, 1
        %s116 = smul.addr %s115, 16
        %s117 = scalar_lea.vmem [#allocation2], %s116
        // Predicated region
        $region25: #{tpu_custom_call.1} parent=23 // pred_check
          %p118 = pneg %p39
        $region26: #{tpu_custom_call.1} parent=23 // pred_check_branch
          %120 = sbr.rel (%p118) target = $region28
        $region27: #{tpu_custom_call.1} parent=23 // pred_region
          %122 = dma.done %s114, 256
        $region28: #{tpu_custom_call.1} parent=23 // pred_fallthru
          _
        %s123 = sand.u32 %s26, 1
        %s124 = scalar_lea.sflag [#allocation3], %s123
        %s125 = sand.u32 %s26, 1
        %s126 = smul.addr %s125, 16
        %s127 = scalar_lea.vmem [#allocation2], %s126
        %p128 = pneg %p39
        %p129 = pneg %p36
        %p130 = pneg %p65
        %p131 = pneg %p62
        %s132 = sand.u32 %s52, 1
        %s133 = scalar_lea.sflag [#allocation4], %s132
        %s134 = sand.u32 %s52, 1
        %s135 = smul.addr %s134, 16
        %s136 = scalar_lea.vmem [#allocation5], %s135
        %v137 = vld [vmem:[%s117] sm:$0xff]
        %v138 = vld [vmem:[%s117 + $0x8] sm:$0xff]
        %v139 = vlaneseq
        %v140 = vand.u32 %v139, 127
        %vm141 = vcmp.eq.s32.totalorder %v140, 0
        %142 = vrot.lane.b32.xlu0 %v137, 1
        %v143 = vpop.permute.xlu0 %142
        %144 = vrot.lane.b32.xlu0 %v138, 1
        %v145 = vpop.permute.xlu0 %144
        %v146 = vsel %vm141, 0.0, %v143
        %v147 = vsel %vm141, 0.0, %v145
        %vm148 = vcmp.eq.s32.totalorder %v140, 127
        %149 = vrot.lane.b32.xlu0 %v137, 127
        %v150 = vpop.permute.xlu0 %149
        %151 = vrot.lane.b32.xlu0 %v138, 127
        %v152 = vpop.permute.xlu0 %151
        %v153 = vsel %vm148, 0.0, %v150
        %v154 = vsel %vm148, 0.0, %v152
        %v155 = vsub.f32 %v153, %v146
        %v156 = vsub.f32 %v154, %v147
        %v157 = vmul.f32 %v137, 2.0
        %v158 = vmul.f32 %v138, 2.0
        %v159 = vadd.f32 %v146, %v157
        %v160 = vadd.f32 %v147, %v158
        %v161 = vadd.f32 %v159, %v153
        %v162 = vadd.f32 %v160, %v154
        %v163 = vlaneseq
        %v164 = vshrl.u32 %v163, 7
        %v165 = vadd.s32 %v164, 8
        %vm166 = vcmp.eq.s32.totalorder %v164, 0
        %vm167 = vcmp.eq.s32.totalorder %v165, 0
        %v168 = vrot.slane %v155, 7
        %v169 = vrot.slane %v156, 7
        %vm170 = vcmp.lt.s32.totalorder %v164, 1
        %v171 = vsel %vm170, %v168, %v169
        %v172 = vsel %vm170, %v169, %v168
        %v173 = vsel %vm166, 0.0, %v172
        %v174 = vsel %vm167, 0.0, %v171
        %vm175 = vcmp.eq.s32.totalorder %v164, 15
        %vm176 = vcmp.eq.s32.totalorder %v165, 15
        %v177 = vrot.slane %v155, 1
        %v178 = vrot.slane %v156, 1
        %vm179 = vcmp.lt.s32.totalorder %v164, 7
        %v180 = vsel %vm179, %v177, %v178
        %v181 = vsel %vm179, %v178, %v177
        %v182 = vsel %vm175, 0.0, %v180
        %v183 = vsel %vm176, 0.0, %v181
        %v184 = vrot.slane %v161, 7
        %v185 = vrot.slane %v162, 7
        %v186 = vsel %vm170, %v184, %v185
        %v187 = vsel %vm170, %v185, %v184
        %v188 = vsel %vm166, 0.0, %v187
        %v189 = vsel %vm167, 0.0, %v186
        %v190 = vrot.slane %v161, 1
        %v191 = vrot.slane %v162, 1
        %v192 = vsel %vm179, %v190, %v191
        %v193 = vsel %vm179, %v191, %v190
        %v194 = vsel %vm175, 0.0, %v192
        %v195 = vsel %vm176, 0.0, %v193
        %v196 = vmul.f32 %v155, 2.0
        %v197 = vmul.f32 %v156, 2.0
        %v198 = vadd.f32 %v173, %v196
        %v199 = vadd.f32 %v174, %v197
        %v200 = vadd.f32 %v198, %v182
        %v201 = vadd.f32 %v199, %v183
        %v202 = vsub.f32 %v194, %v188
        %v203 = vsub.f32 %v195, %v189
        %v204 = vand.u32 2147483647, %v200
        %v205 = vand.u32 2147483647, %v201
        %v206 = vand.u32 2147483647, %v202
        %v207 = vand.u32 2147483647, %v203
        %v208 = vadd.f32 %v204, %v206
        %v209 = vadd.f32 %v205, %v207
        %210 = vst [vmem:[%s136] sm:$0xff] %v208
        %211 = vst [vmem:[%s136 + $0x8] sm:$0xff] %v209
        %s212 = sand.u32 %s52, 1
        %s213 = scalar_lea.sflag [#allocation4], %s212
        %s214 = sand.u32 %s52, 1
        %s215 = smul.addr %s214, 16
        %s216 = scalar_lea.vmem [#allocation5], %s215
        // Predicated region
        $region29: #{tpu_custom_call.1} parent=23 // pred_check
          %p217 = pneg %p62
        $region30: #{tpu_custom_call.1} parent=23 // pred_check_branch
          %219 = sbr.rel (%p217) target = $region32
        $region31: #{tpu_custom_call.1} parent=23 // pred_region
          %221 = vsyncadd %s213, 0
          %s222 = smul.addr %s18, 2
          %s223 = smul.addr %s222, 8
          %s224 = scalar_lea.hbm %s1, %s223
          %s225 = sshll.u32 %s216, 4
          %s226 = int_to_ptr.vmem [resolvable:$true] %s225
          %s227 = sshll.u32 %s224, 4
          %s228 = int_to_ptr.hbm [resolvable:$true] %s227
          %233 = dma.vmem_to_hbm [thread:$0]  %s226, 256, %s228, %s213, 128, 128, 8
        $region32: #{tpu_custom_call.1} parent=23 // pred_fallthru
          _
      $region24: #{tpu_custom_call.1} parent=5 // pred_fallthru
        _
      %p234 = scmp.le.s32.totalorder 2, %s13
      // Predicated region
      $region33: #{tpu_custom_call.1} parent=5 // pred_check
        %p235 = pneg %p234
      $region34: #{tpu_custom_call.1} parent=5 // pred_check_branch
        %237 = sbr.rel (%p235) target = $region36
      $region35: #{tpu_custom_call.1} parent=5 // pred_region
        %s238 = ssub.s32 %s13, 2
        // Predicated region
        $region37: #{tpu_custom_call.1} parent=35 // pred_check
          %p239 = pneg %p68
        $region38: #{tpu_custom_call.1} parent=35 // pred_check_branch
          %241 = sbr.rel (%p239) target = $region40
        $region39: #{tpu_custom_call.1} parent=35 // pred_region
          %s242 = sand.u32 %s53, 1
          %s243 = scalar_lea.sflag [#allocation4], %s242
          %s244 = sand.u32 %s53, 1
          %s245 = smul.addr %s244, 16
          %s246 = scalar_lea.vmem [#allocation5], %s245
          %248 = dma.done %s243, 256
        $region40: #{tpu_custom_call.1} parent=35 // pred_fallthru
          _
      $region36: #{tpu_custom_call.1} parent=5 // pred_fallthru
        _
    $region6: #{tpu_custom_call.1} parent=1 // loop_footer
      %s17 = sadd.s32 1, %s13
    $region7: #{tpu_custom_call.1} parent=1 // loop_footer_branch
      %12 = sbr.rel target = $region3
    $region8: #{tpu_custom_call.1} parent=1 // loop_exit
      _
    %249 = vsyncpa [#allocation3], 1
    %s250 = scalar_lea.sflag [#allocation3], 1
    %251 = vsyncpa %s250, 1
    %252 = vsyncpa [#allocation4], 1
    %s253 = scalar_lea.sflag [#allocation4], 1
    %254 = vsyncpa %s253, 1

</llo_original>
